<compile_context>
chip_gen: v6e
topology: v6e:2x2x1
jax: 0.10.0
libtpu: 0.0.40
codegen_flags: <defaults>
</compile_context>

<pallas_src>
import functools

import jax
import jax.numpy as jnp
from jax.experimental import pallas as pl
from jax.experimental.pallas import tpu as pltpu


# --------------------------------------------------------------------------
# Pallas kernels
# --------------------------------------------------------------------------
def _mm_bias_act_kernel(x_ref, w_ref, b_ref, o_ref, *, neg_slope):
    """o = act(x @ w + b); x:(TM,K) bf16, w:(K,N) bf16, b:(1,N) f32, o:(TM,N) f32."""
    acc = jnp.dot(x_ref[...], w_ref[...], preferred_element_type=jnp.float32)
    acc = acc + b_ref[...]
    if neg_slope is not None:
        acc = jnp.where(acc >= 0.0, acc, jnp.float32(neg_slope) * acc)
    o_ref[...] = acc.astype(o_ref.dtype)


def _rowsum_bias_kernel(x_ref, w_ref, b_ref, o_ref, *, neg_slope):
    """Cout==1 conv: o = act(sum_k x*w + b) as a VPU mul + cross-lane reduce."""
    acc = jnp.sum(x_ref[...] * w_ref[...], axis=-1, keepdims=True) + b_ref[...]
    if neg_slope is not None:
        acc = jnp.where(acc >= 0.0, acc, jnp.float32(neg_slope) * acc)
    o_ref[...] = acc.astype(o_ref.dtype)


def _self_attention_kernel(gamma_ref, x_ref, wq_ref, bq_ref, wk_ref, bk_ref,
                           wv_ref, bv_ref, o_ref):
    """Fused SAGAN attention for one batch: o = gamma * softmax(qk^T) v + x."""
    x = x_ref[0]                              # (N, C) f32 residual
    xb = x.astype(jnp.bfloat16)               # MXU operand
    q = jnp.dot(xb, wq_ref[...], preferred_element_type=jnp.float32) + bq_ref[...]
    k = jnp.dot(xb, wk_ref[...], preferred_element_type=jnp.float32) + bk_ref[...]
    v = jnp.dot(xb, wv_ref[...], preferred_element_type=jnp.float32) + bv_ref[...]
    s = jax.lax.dot_general(q, k, dimension_numbers=(((1,), (1,)), ((), ())),
                            preferred_element_type=jnp.float32)        # (N, N)
    m = jnp.max(s, axis=-1, keepdims=True)
    p = jnp.exp(s - m)
    denom = jnp.sum(p, axis=-1, keepdims=True)                          # (N, 1)
    out = jnp.dot(p, v, preferred_element_type=jnp.float32)             # (N, C)
    out = out * pl.reciprocal(denom, approx=True)                       # EUP slot
    o_ref[0] = gamma_ref[0] * out + x                                   # SMEM scalar


# --------------------------------------------------------------------------
# Wrappers around pallas_call
# --------------------------------------------------------------------------
def matmul_bias_act(x, w, b, neg_slope=None):
    """x:(M,K) @ w:(K,N) + b:(N,), optional LeakyReLU.

    Full-M tile when M <= 64; otherwise two balanced row tiles (feeds both
    v7x TensorCores; on v5e/v6e the extra grid step costs ~0.35us).
    """
    M, K = x.shape
    N = w.shape[1]
    if M <= 64:
        tm = M
    else:
        tm = (((M + 1) // 2 + 15) // 16) * 16  # ~half of M, bf16 sublane aligned
    grid = (pl.cdiv(M, tm),)
    return pl.pallas_call(
        functools.partial(_mm_bias_act_kernel, neg_slope=neg_slope),
        out_shape=jax.ShapeDtypeStruct((M, N), jnp.float32),
        grid=grid,
        in_specs=[
            pl.BlockSpec((tm, K), lambda i: (i, 0)),
            pl.BlockSpec((K, N), lambda i: (0, 0)),
            pl.BlockSpec((1, N), lambda i: (0, 0)),
        ],
        out_specs=pl.BlockSpec((tm, N), lambda i: (i, 0)),
        compiler_params=pltpu.CompilerParams(dimension_semantics=("parallel",)),
    )(x, w, b.reshape(1, N))


def self_attention(x_nhwc, wq, bq, wk, bk, wv, bv, gamma):
    """Fused self-attention block; one pallas_call, grid over batch."""
    B, H, W, C = x_nhwc.shape
    N = H * W
    C8 = wq.shape[1]
    x3 = x_nhwc.reshape(B, N, C)
    out = pl.pallas_call(
        _self_attention_kernel,
        out_shape=jax.ShapeDtypeStruct((B, N, C), jnp.float32),
        grid=(B,),
        in_specs=[
            pl.BlockSpec(memory_space=pltpu.MemorySpace.SMEM),   # gamma (1,)
            pl.BlockSpec((1, N, C), lambda b: (b, 0, 0)),        # x (residual)
            pl.BlockSpec((C, C8), lambda b: (0, 0)),             # wq (bf16)
            pl.BlockSpec((1, C8), lambda b: (0, 0)),             # bq
            pl.BlockSpec((C, C8), lambda b: (0, 0)),             # wk (bf16)
            pl.BlockSpec((1, C8), lambda b: (0, 0)),             # bk
            pl.BlockSpec((C, C), lambda b: (0, 0)),              # wv (bf16)
            pl.BlockSpec((1, C), lambda b: (0, 0)),              # bv
        ],
        out_specs=pl.BlockSpec((1, N, C), lambda b: (b, 0, 0)),
        compiler_params=pltpu.CompilerParams(dimension_semantics=("parallel",)),
    )(gamma, x3,
      wq.astype(jnp.bfloat16), bq.reshape(1, C8),
      wk.astype(jnp.bfloat16), bk.reshape(1, C8),
      wv.astype(jnp.bfloat16), bv.reshape(1, C))
    return out.reshape(B, H, W, C)


# --------------------------------------------------------------------------
# Glue: im2col patch extraction (pure data movement, stays in JAX)
# --------------------------------------------------------------------------
def _extract_patches(x_nhwc, kh, kw, stride, pad):
    B, H, W, C = x_nhwc.shape
    xp = jnp.pad(x_nhwc, ((0, 0), (pad, pad), (pad, pad), (0, 0)))
    Ho = (H + 2 * pad - kh) // stride + 1
    Wo = (W + 2 * pad - kw) // stride + 1
    slabs = []
    for i in range(kh):
        for j in range(kw):
            slabs.append(xp[:, i:i + stride * Ho:stride,
                            j:j + stride * Wo:stride, :])
    patches = jnp.stack(slabs, axis=-2)              # (B, Ho, Wo, kh*kw, C)
    return patches.reshape(B * Ho * Wo, kh * kw * C), Ho, Wo


def _pad_axis_to_multiple(a, axis, mult):
    size = a.shape[axis]
    extra = (-size) % mult
    if extra == 0:
        return a
    widths = [(0, 0)] * a.ndim
    widths[axis] = (0, extra)
    return jnp.pad(a, widths)


def conv2d(x_nhwc, w_hwio, b, stride, pad, neg_slope=None):
    """Conv2d(+bias, optional LeakyReLU).  w_hwio: (kh, kw, Cin, Cout)."""
    B = x_nhwc.shape[0]
    kh, kw, cin, cout = w_hwio.shape
    patches, Ho, Wo = _extract_patches(x_nhwc, kh, kw, stride, pad)
    wm = w_hwio.reshape(kh * kw * cin, cout)
    if cout == 1:
        # N=1 would waste 255/256 MXU columns and hit masked width-1 stores;
        # run as an f32 VPU/XLU row reduction instead (single grid step).
        M, K = patches.shape
        out = pl.pallas_call(
            functools.partial(_rowsum_bias_kernel, neg_slope=neg_slope),
            out_shape=jax.ShapeDtypeStruct((M, 1), jnp.float32),
        )(patches, wm.reshape(1, K), b.reshape(1, 1))
    else:
        # zero-pad K to a lane multiple so bf16 operands are aligned (only
        # conv1, K=27 -> 128; zeros contribute nothing to the dot).
        patches = _pad_axis_to_multiple(patches, 1, 128).astype(jnp.bfloat16)
        wm = _pad_axis_to_multiple(wm, 0, 128).astype(jnp.bfloat16)
        out = matmul_bias_act(patches, wm, b, neg_slope=neg_slope)
    return out.reshape(B, Ho, Wo, cout)


# --------------------------------------------------------------------------
# Parameters (deterministic synthetic init) and forward
# --------------------------------------------------------------------------
def init_params(key):
    def nrm(k, shape, scale=0.05):
        return scale * jax.random.normal(k, shape, dtype=jnp.float32)

    ks = iter(jax.random.split(key, 32))
    p = {}
    p["conv1_w"] = nrm(next(ks), (3, 3, 3, 64));    p["conv1_b"] = nrm(next(ks), (64,))
    p["conv2_w"] = nrm(next(ks), (3, 3, 64, 128));  p["conv2_b"] = nrm(next(ks), (128,))
    p["conv3_w"] = nrm(next(ks), (3, 3, 128, 256)); p["conv3_b"] = nrm(next(ks), (256,))
    p["conv4_w"] = nrm(next(ks), (5, 5, 256, 1));   p["conv4_b"] = nrm(next(ks), (1,))
    # SelfAttention(128): q,k -> 16 channels, v -> 128
    p["sa1_wq"] = nrm(next(ks), (128, 16));  p["sa1_bq"] = nrm(next(ks), (16,))
    p["sa1_wk"] = nrm(next(ks), (128, 16));  p["sa1_bk"] = nrm(next(ks), (16,))
    p["sa1_wv"] = nrm(next(ks), (128, 128)); p["sa1_bv"] = nrm(next(ks), (128,))
    # torch init for gamma is 0.0; use a nonzero value so the attention path
    # actually contributes in this synthetic run.
    p["sa1_gamma"] = jnp.full((1,), 0.5, jnp.float32)
    # SelfAttention(256): q,k -> 32 channels, v -> 256
    p["sa2_wq"] = nrm(next(ks), (256, 32));  p["sa2_bq"] = nrm(next(ks), (32,))
    p["sa2_wk"] = nrm(next(ks), (256, 32));  p["sa2_bk"] = nrm(next(ks), (32,))
    p["sa2_wv"] = nrm(next(ks), (256, 256)); p["sa2_bv"] = nrm(next(ks), (256,))
    p["sa2_gamma"] = jnp.full((1,), 0.5, jnp.float32)
    return p


def discriminator_forward(x_nchw, p):
    x = jnp.transpose(x_nchw, (0, 2, 3, 1))  # NCHW -> NHWC
    out = conv2d(x, p["conv1_w"], p["conv1_b"], stride=2, pad=1, neg_slope=0.2)
    out = conv2d(out, p["conv2_w"], p["conv2_b"], stride=2, pad=1, neg_slope=0.2)
    out = self_attention(out, p["sa1_wq"], p["sa1_bq"], p["sa1_wk"], p["sa1_bk"],
                         p["sa1_wv"], p["sa1_bv"], p["sa1_gamma"])
    out = conv2d(out, p["conv3_w"], p["conv3_b"], stride=2, pad=1, neg_slope=0.2)
    out = self_attention(out, p["sa2_wq"], p["sa2_bq"], p["sa2_wk"], p["sa2_bk"],
                         p["sa2_wv"], p["sa2_bv"], p["sa2_gamma"])
    out = conv2d(out, p["conv4_w"], p["conv4_b"], stride=1, pad=2, neg_slope=None)
    # match torch: out.view(B, -1) on the NCHW tensor (Cout == 1 here)
    out_nchw = jnp.transpose(out, (0, 3, 1, 2))
    return out_nchw.reshape(x_nchw.shape[0], -1)


if __name__ == "__main__":
    key = jax.random.PRNGKey(0)
    kx, kp = jax.random.split(key)
    x = jax.random.normal(kx, (2, 3, 16, 16), dtype=jnp.float32)  # NCHW input
    params = init_params(kp)

    out = discriminator_forward(x, params)
    out = jax.block_until_ready(out)

    # 16 -> 8 -> 4 -> 2 spatial; final conv keeps 2x2, 1 channel => (2, 4)
    assert out.shape == (2, 4), out.shape
    assert jnp.all(jnp.isfinite(out))
    print("KERNEL_OK")
</pallas_src>

<mosaic_0001>
module attributes {stable_mosaic.version = 11 : i64} {
  func.func @_mm_bias_act_kernel(%arg0: i32, %arg1: memref<64x128xbf16, #tpu.memory_space<vmem>>, %arg2: memref<128x64xbf16, #tpu.memory_space<vmem>>, %arg3: memref<1x64xf32, #tpu.memory_space<vmem>>, %arg4: memref<64x64xf32, #tpu.memory_space<vmem>>) attributes {dimension_semantics = [#tpu.dimension_semantics<parallel>], iteration_bounds = array<i64: 2>, scalar_prefetch = 0 : i64, scratch_operands = 0 : i64, tpu.core_type = #tpu.core_type<tc>, window_params = [{transform_indices = @transform_0, window_bounds = array<i64: 64, 128>}, {pipeline_mode = #tpu.pipeline_mode<synchronous>, transform_indices = @transform_1, window_bounds = array<i64: 128, 64>}, {pipeline_mode = #tpu.pipeline_mode<synchronous>, transform_indices = @transform_2, window_bounds = array<i64: 1, 64>}, {transform_indices = @transform_3, window_bounds = array<i64: 64, 64>}]} {
    %c0 = arith.constant 0 : index
    %c0_0 = arith.constant 0 : index
    %0 = vector.load %arg1[%c0, %c0_0] : memref<64x128xbf16, #tpu.memory_space<vmem>>, vector<64x128xbf16>
    %c0_1 = arith.constant 0 : index
    %c0_2 = arith.constant 0 : index
    %1 = vector.load %arg2[%c0_1, %c0_2] : memref<128x64xbf16, #tpu.memory_space<vmem>>, vector<128x64xbf16>
    %cst = arith.constant dense<0.000000e+00> : vector<64x64xf32>
    %2 = tpu.matmul %0, %1, %cst {dimension_numbers = #tpu.dot_dimension_numbers<[1], [0], [0], [1], [0, 0, 1, 1], [], []>} : vector<64x128xbf16>, vector<128x64xbf16>, vector<64x64xf32> -> vector<64x64xf32>
    %c0_3 = arith.constant 0 : index
    %c0_4 = arith.constant 0 : index
    %3 = vector.load %arg3[%c0_3, %c0_4] : memref<1x64xf32, #tpu.memory_space<vmem>>, vector<1x64xf32>
    %4 = vector.broadcast %3 : vector<1x64xf32> to vector<64x64xf32>
    %5 = arith.addf %2, %4 : vector<64x64xf32>
    %cst_5 = arith.constant 0.000000e+00 : f32
    %6 = vector.broadcast %cst_5 : f32 to vector<64x64xf32>
    %7 = arith.cmpf oge, %5, %6 : vector<64x64xf32>
    %cst_6 = arith.constant 2.000000e-01 : f32
    %8 = vector.broadcast %cst_6 : f32 to vector<64x64xf32>
    %9 = arith.mulf %8, %5 : vector<64x64xf32>
    %10 = arith.select %7, %5, %9 : vector<64x64xi1>, vector<64x64xf32>
    %c0_7 = arith.constant 0 : index
    %c0_8 = arith.constant 0 : index
    %11 = vector.load %arg4[%c0_7, %c0_8] : memref<64x64xf32, #tpu.memory_space<vmem>>, vector<64x64xf32>
    tpu.vector_store %arg4[%c0_7, %c0_8], %10 {strides = array<i32>} : memref<64x64xf32, #tpu.memory_space<vmem>>, vector<64x64xf32>,
    return
  }
  func.func @transform_0(%arg0: i32) -> (i32, i32) {
    %c0_i32 = arith.constant 0 : i32
    %c0_i32_0 = arith.constant 0 : i32
    return %arg0, %c0_i32 : i32, i32
  }
  func.func @transform_1(%arg0: i32) -> (i32, i32) {
    %c0_i32 = arith.constant 0 : i32
    %c0_i32_0 = arith.constant 0 : i32
    %c0_i32_1 = arith.constant 0 : i32
    return %c0_i32, %c0_i32_0 : i32, i32
  }
  func.func @transform_2(%arg0: i32) -> (i32, i32) {
    %c0_i32 = arith.constant 0 : i32
    %c0_i32_0 = arith.constant 0 : i32
    %c0_i32_1 = arith.constant 0 : i32
    return %c0_i32, %c0_i32_0 : i32, i32
  }
  func.func @transform_3(%arg0: i32) -> (i32, i32) {
    %c0_i32 = arith.constant 0 : i32
    %c0_i32_0 = arith.constant 0 : i32
    return %arg0, %c0_i32 : i32, i32
  }
}

</mosaic_0001>

<llo_original>
// kernel: tpu_custom_call.1
$region0: #{tpu_custom_call.1}
  #allocation0 [shape = 'u32[]', space=smem, size = 0x4, offset = 0x4, fixed_abs, tag = 'smem constant byte address 0x4 - core index']
  #allocation1 [shape = 'u32[144,128]{1,0:T(1,128)}', space=vmem, size = 0x12000, scoped, tag = 'internal scratch']
  %s0 = inlined_call_operand.vmem [shape: bf16[128,128], index: 0, kind: input, shape index: {}]
  %s1 = inlined_call_operand.vmem [shape: bf16[128,64], index: 1, kind: input, shape index: {}]
  %s2 = inlined_call_operand.vmem [shape: f32[1,64], index: 2, kind: input, shape index: {}]
  %s3 = inlined_call_operand.vmem [shape: f32[128,64], index: 3, kind: output, shape index: {}]
  %s4 = sld [smem:[#allocation0]]
  $region45: #{tpu_custom_call.1} parent=0
    _
  %s6 = ssub.s32 1, %s4
  %s7 = scalar_select 0, %s6, %s4
  loop: start=0, step=1, limit=4
  $region2: #{tpu_custom_call.1} parent=0 // loop_pre_header
    _
  $region3: #{tpu_custom_call.1} parent=0 // loop_header
    %s9 = sphi 0, %s13
    %p10 = scmp.ge.s32.totalorder %s9, 4
    %s19 = sphi 0, %s21
    %s22 = sphi 0, %s19
    %s23 = sphi 0, %s22
    %s39 = sphi 0, %s23
    %s43 = sphi 0, %s43
    %s45 = sphi 0, %s43
    %s46 = sphi 0, %s45
    %s60 = sphi 0, %s46
    %s64 = sphi 0, %s64
    %s66 = sphi 0, %s64
    %s67 = sphi 0, %s66
    %s81 = sphi 0, %s67
    %s87 = sphi 0, %s89
    %s90 = sphi 0, %s87
    %s91 = sphi 0, %s90
    %s107 = sphi 0, %s91
  $region4: #{tpu_custom_call.1} parent=0 // loop_header_branch
    %12 = sbr.rel (%p10) target = $region8
  $region5: #{tpu_custom_call.1} parent=0 // loop_body
    %s14 = ssub.s32 %s9, 1
    %s15 = ssub.s32 %s9, 2
    %s16 = sadd.s32 %s9, 1
    %s17 = ssub.s32 %s9, %s16
    %p18 = scmp.eq.s32.totalorder %s17, 0
    %s20 = sadd.s32 %s19, 1
    %s21 = scalar_select %p18, %s19, %s20
    %p24 = pneg %p18
    %p25 = scmp.eq.s32.totalorder %s9, 1
    %p26 = por %p24, %p25
    %p27 = scmp.ne.s32.totalorder %s19, %s22
    %p28 = scmp.eq.s32.totalorder %s9, 0
    %p29 = por %p27, %p28
    %p30 = scmp.ne.s32.totalorder %s19, %s22
    %p31 = scmp.eq.s32.totalorder %s14, 1
    %p32 = por %p30, %p31
    %p33 = scmp.ne.s32.totalorder %s22, %s23
    %p34 = scmp.eq.s32.totalorder %s14, 0
    %p35 = por %p33, %p34
    %p36 = scmp.ne.s32.totalorder %s22, %s23
    %p37 = scmp.eq.s32.totalorder %s15, 1
    %p38 = por %p36, %p37
    %p40 = scmp.ne.s32.totalorder %s23, %s39
    %p41 = scmp.eq.s32.totalorder %s15, 0
    %p42 = por %p40, %p41
    %s44 = sadd.s32 %s43, 1
    %p47 = scmp.eq.s32.totalorder %s9, 1
    %p48 = scmp.ne.s32.totalorder %s43, %s45
    %p49 = scmp.eq.s32.totalorder %s9, 0
    %p50 = por %p48, %p49
    %p51 = scmp.ne.s32.totalorder %s43, %s45
    %p52 = scmp.eq.s32.totalorder %s14, 1
    %p53 = por %p51, %p52
    %p54 = scmp.ne.s32.totalorder %s45, %s46
    %p55 = scmp.eq.s32.totalorder %s14, 0
    %p56 = por %p54, %p55
    %p57 = scmp.ne.s32.totalorder %s45, %s46
    %p58 = scmp.eq.s32.totalorder %s15, 1
    %p59 = por %p57, %p58
    %p61 = scmp.ne.s32.totalorder %s46, %s60
    %p62 = scmp.eq.s32.totalorder %s15, 0
    %p63 = por %p61, %p62
    %s65 = sadd.s32 %s64, 1
    %p68 = scmp.eq.s32.totalorder %s9, 1
    %p69 = scmp.ne.s32.totalorder %s64, %s66
    %p70 = scmp.eq.s32.totalorder %s9, 0
    %p71 = por %p69, %p70
    %p72 = scmp.ne.s32.totalorder %s64, %s66
    %p73 = scmp.eq.s32.totalorder %s14, 1
    %p74 = por %p72, %p73
    %p75 = scmp.ne.s32.totalorder %s66, %s67
    %p76 = scmp.eq.s32.totalorder %s14, 0
    %p77 = por %p75, %p76
    %p78 = scmp.ne.s32.totalorder %s66, %s67
    %p79 = scmp.eq.s32.totalorder %s15, 1
    %p80 = por %p78, %p79
    %p82 = scmp.ne.s32.totalorder %s67, %s81
    %p83 = scmp.eq.s32.totalorder %s15, 0
    %p84 = por %p82, %p83
    %s85 = ssub.s32 %s9, %s16
    %p86 = scmp.eq.s32.totalorder %s85, 0
    %s88 = sadd.s32 %s87, 1
    %s89 = scalar_select %p86, %s87, %s88
    %p92 = pneg %p86
    %p93 = scmp.eq.s32.totalorder %s9, 1
    %p94 = por %p92, %p93
    %p95 = scmp.ne.s32.totalorder %s87, %s90
    %p96 = scmp.eq.s32.totalorder %s9, 0
    %p97 = por %p95, %p96
    %p98 = scmp.ne.s32.totalorder %s87, %s90
    %p99 = scmp.eq.s32.totalorder %s14, 1
    %p100 = por %p98, %p99
    %p101 = scmp.ne.s32.totalorder %s90, %s91
    %p102 = scmp.eq.s32.totalorder %s14, 0
    %p103 = por %p101, %p102
    %p104 = scmp.ne.s32.totalorder %s90, %s91
    %p105 = scmp.eq.s32.totalorder %s15, 1
    %p106 = por %p104, %p105
    %p108 = scmp.ne.s32.totalorder %s91, %s107
    %p109 = scmp.eq.s32.totalorder %s15, 0
    %p110 = por %p108, %p109
    %p111 = scmp.le.s32.totalorder 1, %s9
    %p112 = scmp.lt.s32.totalorder %s9, 3
    %p113 = pnand %p111, %p112
    %p114 = pneg %p113
    // Predicated region
    $region9: #{tpu_custom_call.1} parent=5 // pred_check
      _
    $region10: #{tpu_custom_call.1} parent=5 // pred_check_branch
      %116 = sbr.rel (%p113) target = $region12
    $region11: #{tpu_custom_call.1} parent=5 // pred_region
      %s117 = ssub.s32 %s9, 1
      // Predicated region
      $region13: #{tpu_custom_call.1} parent=11 // pred_check
        %p118 = pneg %p56
      $region14: #{tpu_custom_call.1} parent=11 // pred_check_branch
        %120 = sbr.rel (%p118) target = $region16
      $region15: #{tpu_custom_call.1} parent=11 // pred_region
        _
      $region16: #{tpu_custom_call.1} parent=11 // pred_fallthru
        _
      // Predicated region
      $region17: #{tpu_custom_call.1} parent=11 // pred_check
        %p121 = pneg %p77
      $region18: #{tpu_custom_call.1} parent=11 // pred_check_branch
        %123 = sbr.rel (%p121) target = $region20
      $region19: #{tpu_custom_call.1} parent=11 // pred_region
        _
      $region20: #{tpu_custom_call.1} parent=11 // pred_fallthru
        _
    $region12: #{tpu_custom_call.1} parent=5 // pred_fallthru
      _
    %p124 = scmp.lt.s32.totalorder %s9, 2
    // Predicated region
    $region21: #{tpu_custom_call.1} parent=5 // pred_check
      %p125 = pneg %p124
    $region22: #{tpu_custom_call.1} parent=5 // pred_check_branch
      %127 = sbr.rel (%p125) target = $region24
    $region23: #{tpu_custom_call.1} parent=5 // pred_region
      // Predicated region
      $region25: #{tpu_custom_call.1} parent=23 // pred_check
        %p128 = pneg %p29
      $region26: #{tpu_custom_call.1} parent=23 // pred_check_branch
        %130 = sbr.rel (%p128) target = $region28
      $region27: #{tpu_custom_call.1} parent=23 // pred_region
        %s131 = smul.u32 8, %s9
        %p132 = scmp.lt.s32.totalorder %s131, 15
        %s133 = scalar_select %p132, %s131, 15
        %s134 = smul.addr %s133, 4
        %s135 = scalar_lea.vmem %s0, %s134
        %s136 = smul.u32 8, %s9
      $region28: #{tpu_custom_call.1} parent=23 // pred_fallthru
        _
    $region24: #{tpu_custom_call.1} parent=5 // pred_fallthru
      _
    %p137 = scmp.le.s32.totalorder 1, %s9
    %p138 = scmp.lt.s32.totalorder %s9, 3
    %p139 = pnand %p137, %p138
    %p140 = pneg %p139
    // Predicated region
    $region29: #{tpu_custom_call.1} parent=5 // pred_check
      _
    $region30: #{tpu_custom_call.1} parent=5 // pred_check_branch
      %142 = sbr.rel (%p139) target = $region32
    $region31: #{tpu_custom_call.1} parent=5 // pred_region
      %s143 = ssub.s32 %s9, 1
      %s144 = smul.u32 8, %s14
      %p145 = scmp.lt.s32.totalorder %s144, 15
      %s146 = scalar_select %p145, %s144, 15
      %s147 = smul.addr %s146, 4
      %s148 = scalar_lea.vmem %s0, %s147
      %p149 = pneg %p35
      %p150 = pneg %p32
      %p151 = pneg %p56
      %p152 = pneg %p53
      %p153 = pneg %p77
      %p154 = pneg %p74
      %p155 = pneg %p103
      %p156 = pneg %p100
      %s157 = smul.u32 8, %s14
      %p158 = scmp.lt.s32.totalorder %s157, 15
      %s159 = scalar_select %p158, %s157, 15
      %s160 = smul.addr %s159, 8
      %s161 = scalar_lea.vmem %s3, %s160
      %s162 = smul.u32 8, %s14
      %p163 = scmp.lt.s32.totalorder %s162, 15
      %s164 = scalar_select %p163, %s162, 15
      %s165 = smul.addr %s164, 4
      %s166 = scalar_lea.vmem %s0, %s165
      %s167 = smul.u32 8, %s14
      %s168 = smul.u32 8, %s14
      %p169 = scmp.lt.s32.totalorder %s168, 15
      %s170 = scalar_select %p169, %s168, 15
      %s171 = smul.addr %s170, 8
      %s172 = scalar_lea.vmem %s3, %s171
      %s173 = smul.u32 8, %s14
      %v175 = vld [vmem:[%s166] sm:$0xf]
      %v176 = vld [vmem:[%s166 + $0x4] sm:$0xf]
      %v177 = vld [vmem:[%s166 + $0x8] sm:$0xf]
      %v178 = vld [vmem:[%s166 + $0xc] sm:$0xf]
      %v179 = vld [vmem:[%s166 + $0x10] sm:$0xf]
      %v180 = vld [vmem:[%s166 + $0x14] sm:$0xf]
      %v181 = vld [vmem:[%s166 + $0x18] sm:$0xf]
      %v182 = vld [vmem:[%s166 + $0x1c] sm:$0xf]
      %v183 = vld [vmem:[%s1] sm:$0xf]
      %v184 = vld [vmem:[%s1 + $0x4] sm:$0xf]
      %v185 = vld [vmem:[%s1 + $0x8] sm:$0xf]
      %v186 = vld [vmem:[%s1 + $0xc] sm:$0xf]
      %v187 = vld [vmem:[%s1 + $0x10] sm:$0xf]
      %v188 = vld [vmem:[%s1 + $0x14] sm:$0xf]
      %v189 = vld [vmem:[%s1 + $0x18] sm:$0xf]
      %v190 = vld [vmem:[%s1 + $0x1c] sm:$0xf]
      %v191 = vld [vmem:[%s1 + $0x20] sm:$0xf]
      %v192 = vld [vmem:[%s1 + $0x24] sm:$0xf]
      %v193 = vld [vmem:[%s1 + $0x28] sm:$0xf]
      %v194 = vld [vmem:[%s1 + $0x2c] sm:$0xf]
      %v195 = vld [vmem:[%s1 + $0x30] sm:$0xf]
      %v196 = vld [vmem:[%s1 + $0x34] sm:$0xf]
      %v197 = vld [vmem:[%s1 + $0x38] sm:$0xf]
      %v198 = vld [vmem:[%s1 + $0x3c] sm:$0xf]
      %v199 = vld [vmem:[%s2] sm:$0x1]
      %v201 = vlaneseq
      %v202 = vshrl.u32 %v201, 7
      %v203 = vsub.s32 0, %v202
      %v204 = vrot.slane %v199, %v203
      %v214 = vunpack.c.l.b16 %v175
      %v215 = vunpack.c.l.b16 %v176
      %v216 = vunpack.c.l.b16 %v177
      %v217 = vunpack.c.l.b16 %v178
      %v218 = vunpack.c.l.b16 %v179
      %v219 = vunpack.c.l.b16 %v180
      %v220 = vunpack.c.l.b16 %v181
      %v221 = vunpack.c.l.b16 %v182
      %v222 = vpack.c.b16 %v215, %v214
      %v223 = vpack.c.b16 %v217, %v216
      %v224 = vpack.c.b16 %v219, %v218
      %v225 = vpack.c.b16 %v221, %v220
      %v246 = vunpack.c.l.b16 %v183
      %v247 = vunpack.c.l.b16 %v184
      %v248 = vunpack.c.l.b16 %v185
      %v249 = vunpack.c.l.b16 %v186
      %v250 = vunpack.c.l.b16 %v187
      %v251 = vunpack.c.l.b16 %v188
      %v252 = vunpack.c.l.b16 %v189
      %v253 = vunpack.c.l.b16 %v190
      %v254 = vunpack.c.l.b16 %v191
      %v255 = vunpack.c.l.b16 %v192
      %v256 = vunpack.c.l.b16 %v193
      %v257 = vunpack.c.l.b16 %v194
      %v258 = vunpack.c.l.b16 %v195
      %v259 = vunpack.c.l.b16 %v196
      %v260 = vunpack.c.l.b16 %v197
      %v261 = vunpack.c.l.b16 %v198
      %v262 = vpack.c.b16 %v247, %v246
      %v263 = vpack.c.b16 %v249, %v248
      %v264 = vpack.c.b16 %v251, %v250
      %v265 = vpack.c.b16 %v253, %v252
      %v266 = vpack.c.b16 %v255, %v254
      %v267 = vpack.c.b16 %v257, %v256
      %v268 = vpack.c.b16 %v259, %v258
      %v269 = vpack.c.b16 %v261, %v260
      %278 = vmatprep.subr.bf16.mxu0 0
      %279 = vmatpush1.bf16.msra.mxu0 %v269
      %280 = vmatprep.subr.bf16.mxu0 0
      %281 = vmatpush1.bf16.msra.mxu0 %v268
      %282 = vmatprep.subr.bf16.mxu0 0
      %283 = vmatpush1.bf16.msra.mxu0 %v267
      %284 = vmatprep.subr.bf16.mxu0 0
      %285 = vmatpush1.bf16.msra.mxu0 %v266
      %286 = vmatprep.subr.bf16.mxu0 0
      %287 = vmatpush1.bf16.msra.mxu0 %v265
      %288 = vmatprep.subr.bf16.mxu0 0
      %289 = vmatpush1.bf16.msra.mxu0 %v264
      %290 = vmatprep.subr.bf16.mxu0 0
      %291 = vmatpush1.bf16.msra.mxu0 %v263
      %292 = vmatprep.subr.bf16.mxu0 0
      %293 = vmatpush1.bf16.msra.mxu0 %v262
      %294 = vmatprep.subr.bf16.mxu0 0
      %295 = vmatpush2.bf16.msra.mxu0 0
      %296 = vmatprep.subr.bf16.mxu0 0
      %297 = vmatpush2.bf16.msra.mxu0 0
      %298 = vmatprep.subr.bf16.mxu0 0
      %299 = vmatpush2.bf16.msra.mxu0 0
      %300 = vmatprep.subr.bf16.mxu0 0
      %301 = vmatpush2.bf16.msra.mxu0 0
      %302 = vmatprep.subr.bf16.mxu0 0
      %303 = vmatpush2.bf16.msra.mxu0 0
      %304 = vmatprep.subr.bf16.mxu0 0
      %305 = vmatpush2.bf16.msra.mxu0 0
      %306 = vmatprep.subr.bf16.mxu0 0
      %307 = vmatpush2.bf16.msra.mxu0 0
      %308 = vmatprep.subr.bf16.mxu0 0
      %309 = vmatpush2.bf16.msra.mxu0 0
      %310 = vmatprep.mubr.bf16.mxu0 0
      %311 = vmatmul.mubr.bf16.gmra.mxu0 %v222
      %v312 = vpop.f32.mrf.mxu0
      %v313 = vadd.f32 %v204, %v312
      %v314 = vpop.f32.mrf.mxu0
      %v315 = vpop.f32.mrf.mxu0
      %v316 = vadd.f32 %v204, %v315
      %v317 = vpop.f32.mrf.mxu0
      %318 = vmatprep.mubr.bf16.mxu0 0
      %319 = vmatmul.mubr.bf16.gmra.mxu0 %v223
      %v320 = vpop.f32.mrf.mxu0
      %v321 = vadd.f32 %v204, %v320
      %v322 = vpop.f32.mrf.mxu0
      %v323 = vpop.f32.mrf.mxu0
      %v324 = vadd.f32 %v204, %v323
      %v325 = vpop.f32.mrf.mxu0
      %326 = vmatprep.mubr.bf16.mxu0 0
      %327 = vmatmul.mubr.bf16.gmra.mxu0 %v224
      %v328 = vpop.f32.mrf.mxu0
      %v329 = vadd.f32 %v204, %v328
      %v330 = vpop.f32.mrf.mxu0
      %v331 = vpop.f32.mrf.mxu0
      %v332 = vadd.f32 %v204, %v331
      %v333 = vpop.f32.mrf.mxu0
      %334 = vmatprep.mubr.bf16.mxu0 0
      %335 = vmatmul.mubr.bf16.gmra.mxu0 %v225
      %v336 = vpop.f32.mrf.mxu0
      %v337 = vadd.f32 %v204, %v336
      %v338 = vpop.f32.mrf.mxu0
      %v339 = vpop.f32.mrf.mxu0
      %v340 = vadd.f32 %v204, %v339
      %v341 = vpop.f32.mrf.mxu0
      %342 = vdwg.mxu0
      %vm343 = vcmp.ge.f32.partialorder %v313, 0.0
      %vm344 = vcmp.ge.f32.partialorder %v316, 0.0
      %vm345 = vcmp.ge.f32.partialorder %v321, 0.0
      %vm346 = vcmp.ge.f32.partialorder %v324, 0.0
      %vm347 = vcmp.ge.f32.partialorder %v329, 0.0
      %vm348 = vcmp.ge.f32.partialorder %v332, 0.0
      %vm349 = vcmp.ge.f32.partialorder %v337, 0.0
      %vm350 = vcmp.ge.f32.partialorder %v340, 0.0
      %v351 = vmul.f32 %v313, 0.2
      %v352 = vmul.f32 %v316, 0.2
      %v353 = vmul.f32 %v321, 0.2
      %v354 = vmul.f32 %v324, 0.2
      %v355 = vmul.f32 %v329, 0.2
      %v356 = vmul.f32 %v332, 0.2
      %v357 = vmul.f32 %v337, 0.2
      %v358 = vmul.f32 %v340, 0.2
      %v359 = vsel %vm343, %v313, %v351
      %v360 = vsel %vm344, %v316, %v352
      %v361 = vsel %vm345, %v321, %v353
      %v362 = vsel %vm346, %v324, %v354
      %v363 = vsel %vm347, %v329, %v355
      %v364 = vsel %vm348, %v332, %v356
      %v365 = vsel %vm349, %v337, %v357
      %v366 = vsel %vm350, %v340, %v358
      %vm367 = vcmask 523264
      %368 = vst.msk [vmem:[%s172] sm:$0xff] %vm367, %v359
      %369 = vst.msk [vmem:[%s172 + $0x8] sm:$0xff] %vm367, %v360
      %370 = vst.msk [vmem:[%s172 + $0x10] sm:$0xff] %vm367, %v361
      %371 = vst.msk [vmem:[%s172 + $0x18] sm:$0xff] %vm367, %v362
      %372 = vst.msk [vmem:[%s172 + $0x20] sm:$0xff] %vm367, %v363
      %373 = vst.msk [vmem:[%s172 + $0x28] sm:$0xff] %vm367, %v364
      %374 = vst.msk [vmem:[%s172 + $0x30] sm:$0xff] %vm367, %v365
      %375 = vst.msk [vmem:[%s172 + $0x38] sm:$0xff] %vm367, %v366
      %s376 = smul.u32 8, %s14
      %p377 = scmp.lt.s32.totalorder %s376, 15
      %s378 = scalar_select %p377, %s376, 15
      %s379 = smul.addr %s378, 8
      %s380 = scalar_lea.vmem %s3, %s379
      // Predicated region
      $region33: #{tpu_custom_call.1} parent=31 // pred_check
        %p381 = pneg %p100
      $region34: #{tpu_custom_call.1} parent=31 // pred_check_branch
        %383 = sbr.rel (%p381) target = $region36
      $region35: #{tpu_custom_call.1} parent=31 // pred_region
        %s384 = smul.u32 8, %s14
      $region36: #{tpu_custom_call.1} parent=31 // pred_fallthru
        _
    $region32: #{tpu_custom_call.1} parent=5 // pred_fallthru
      _
    %p385 = scmp.le.s32.totalorder 2, %s9
    // Predicated region
    $region37: #{tpu_custom_call.1} parent=5 // pred_check
      %p386 = pneg %p385
    $region38: #{tpu_custom_call.1} parent=5 // pred_check_branch
      %388 = sbr.rel (%p386) target = $region40
    $region39: #{tpu_custom_call.1} parent=5 // pred_region
      %s389 = ssub.s32 %s9, 2
      // Predicated region
      $region41: #{tpu_custom_call.1} parent=39 // pred_check
        %p390 = pneg %p106
      $region42: #{tpu_custom_call.1} parent=39 // pred_check_branch
        %392 = sbr.rel (%p390) target = $region44
      $region43: #{tpu_custom_call.1} parent=39 // pred_region
        %s393 = smul.u32 8, %s15
        %p394 = scmp.lt.s32.totalorder %s393, 15
        %s395 = scalar_select %p394, %s393, 15
        %s396 = smul.addr %s395, 8
        %s397 = scalar_lea.vmem %s3, %s396
      $region44: #{tpu_custom_call.1} parent=39 // pred_fallthru
        _
    $region40: #{tpu_custom_call.1} parent=5 // pred_fallthru
      _
  $region6: #{tpu_custom_call.1} parent=0 // loop_footer
    %s13 = sadd.s32 1, %s9
  $region7: #{tpu_custom_call.1} parent=0 // loop_footer_branch
    %8 = sbr.rel target = $region3
  $region8: #{tpu_custom_call.1} parent=0 // loop_exit
    _

</llo_original>
